<compile_context>
chip_gen: v7x
topology: tpu7x:2x2x1
jax: 0.10.0
libtpu: 0.0.40
codegen_flags: <defaults>
</compile_context>

<pallas_src>
import jax
import jax.numpy as jnp
from jax.experimental import pallas as pl
from jax.experimental.pallas import tpu as pltpu


def _cdiv(a, b):
    return -(-a // b)


def _scaled_sinu_kernel(scale_ref, fp_ref, o_ref):
    """One [tm, w] slab of packed rows: sin(j*row_freq + row_off) * scale."""
    tm, w = o_ref.shape
    row0 = pl.program_id(0) * tm
    # Full-width 2-D iota over the row axis (no lane-1 broadcast), integer add
    # of the block offset, single int->f32 convert.
    j = (jax.lax.broadcasted_iota(jnp.int32, (tm, w), 0) + row0).astype(jnp.float32)
    # fp_ref row 0: per-lane phase step per packed row; row 1: per-lane offset.
    phase = j * fp_ref[0:1, :] + fp_ref[1:2, :]
    o_ref[...] = (jnp.sin(phase) * scale_ref[0]).astype(o_ref.dtype)


def scaled_sinu_embedding(x, params, *, row_tile=512, out_dtype=jnp.float32,
                          vmem_budget_bytes=8 << 20):
    """Pallas ScaledSinuEmbedding forward.

    Args:
      x: array whose second axis is the sequence length (values unused).
      params: {"scale": (1,), "inv_freq": (dim//2,)}
      out_dtype: output dtype (f32 default; bf16 halves HBM store traffic).
    Returns:
      [n, dim] embedding, n = x.shape[1].
    """
    n = x.shape[1]
    inv_freq = params["inv_freq"].astype(jnp.float32)
    half = inv_freq.shape[0]
    dim = 2 * half

    # Lane packing factor: fold r consecutive positions into the lane axis so
    # each packed row is exactly 128 lanes wide.
    r = (128 // dim) if (dim < 128 and 128 % dim == 0) else 1
    w = r * dim
    n_rows = _cdiv(n, r)

    # Per-lane frequency / phase rows (sin half | cos half), replicated r times
    # and pre-combined with the within-row position offset g:
    #   phase(j, l) = (j*r + g) * f_c + off_c = j*(r*f_c) + (g*f_c + off_c)
    freq_full = jnp.concatenate([inv_freq, inv_freq])                     # [dim]
    off_full = jnp.concatenate([jnp.zeros((half,), jnp.float32),
                                jnp.full((half,), jnp.pi / 2, jnp.float32)])
    freq_lane = jnp.tile(freq_full, r)                                    # [w]
    g_lane = jnp.repeat(jnp.arange(r, dtype=jnp.float32), dim)            # [w]
    row_freq = jnp.float32(r) * freq_lane
    row_off = g_lane * freq_lane + jnp.tile(off_full, r)
    fp = jnp.stack([row_freq, row_off], axis=0)                           # [2, w]

    scale = params["scale"].astype(jnp.float32).reshape((1,))

    # Row tile: VMEM budget for the double-buffered output, sublane aligned
    # (16 for bf16 packed sublanes), and capped so n_rows <= row_tile still
    # yields >= 2 grid steps (keeps both v7x TensorCores busy).
    sub = 16 if jnp.dtype(out_dtype) == jnp.dtype(jnp.bfloat16) else 8
    bytes_per_row = w * jnp.dtype(out_dtype).itemsize
    tm_budget = max(sub, (vmem_budget_bytes // (2 * bytes_per_row)) // sub * sub)
    tm = max(sub, min(row_tile, tm_budget) // sub * sub)
    if n_rows <= tm:
        tm = max(sub, _cdiv(_cdiv(n_rows, 2), sub) * sub)
    grid = (_cdiv(n_rows, tm),)

    out = pl.pallas_call(
        _scaled_sinu_kernel,
        out_shape=jax.ShapeDtypeStruct((n_rows, w), out_dtype),
        grid=grid,
        in_specs=[
            pl.BlockSpec(memory_space=pltpu.MemorySpace.SMEM),   # scale (scalar)
            pl.BlockSpec((2, w), lambda i: (0, 0)),              # fused freq/offset
        ],
        out_specs=pl.BlockSpec((tm, w), lambda i: (i, 0)),
        compiler_params=pltpu.CompilerParams(
            dimension_semantics=("parallel",)),
    )(scale, fp)

    emb = out.reshape(n_rows * r, dim)      # contiguous reshape: free
    if n_rows * r != n:
        emb = emb[:n]                        # only trims < r rows when n % r != 0
    return emb


def init_scaled_sinu_params(dim, dtype=jnp.float32):
    """Mirror the PyTorch __init__: scale = ones(1), inv_freq buffer."""
    inv_freq = 1.0 / (10000.0 ** (jnp.arange(0, dim, 2, dtype=jnp.float32) / dim))
    return {"scale": jnp.ones((1,), dtype), "inv_freq": inv_freq.astype(dtype)}


def scaled_sinu_embedding_ref(x, params):
    """Pure-JAX reference mirroring the PyTorch forward exactly."""
    n = x.shape[1]
    t = jnp.arange(n, dtype=jnp.float32)
    sinu = jnp.einsum("i,j->ij", t, params["inv_freq"].astype(jnp.float32))
    emb = jnp.concatenate([jnp.sin(sinu), jnp.cos(sinu)], axis=-1)
    return emb * params["scale"]


if __name__ == "__main__":
    key = jax.random.PRNGKey(0)
    k0, k1 = jax.random.split(key)

    # Small shapes consistent with the module: batch=2, seq=8, dim=32.
    batch, seq, dim = 2, 8, 32
    x = jax.random.normal(k0, (batch, seq, dim), jnp.float32)
    params = init_scaled_sinu_params(dim)

    out = jax.block_until_ready(scaled_sinu_embedding(x, params))
    ref = scaled_sinu_embedding_ref(x, params)
    assert out.shape == (seq, dim), out.shape
    assert jnp.allclose(out, ref, atol=1e-5, rtol=1e-5), "mismatch vs reference"

    # Second check: ragged tail (n % r != 0), partial last block, >1 grid step.
    seq2, dim2 = 301, 64
    x2 = jax.random.normal(k1, (2, seq2, dim2), jnp.float32)
    params2 = init_scaled_sinu_params(dim2)
    out2 = jax.block_until_ready(scaled_sinu_embedding(x2, params2))
    ref2 = scaled_sinu_embedding_ref(x2, params2)
    assert out2.shape == (seq2, dim2), out2.shape
    assert jnp.allclose(out2, ref2, atol=1e-4, rtol=1e-4), "mismatch vs reference (large)"

    print("KERNEL_OK")
</pallas_src>

<mosaic_0001>
module attributes {stable_mosaic.version = 11 : i64} {
  func.func @_scaled_sinu_kernel(%arg0: i32, %arg1: memref<1xf32, #tpu.memory_space<smem>>, %arg2: memref<2x128xf32, #tpu.memory_space<vmem>>, %arg3: memref<8x128xf32, #tpu.memory_space<vmem>>) attributes {dimension_semantics = [#tpu.dimension_semantics<parallel>], iteration_bounds = array<i64: 1>, scalar_prefetch = 0 : i64, scratch_operands = 0 : i64, tpu.core_type = #tpu.core_type<tc>, window_params = [{transform_indices = @transform_0, window_bounds = array<i64: 1>}, {pipeline_mode = #tpu.pipeline_mode<synchronous>, transform_indices = @transform_1, window_bounds = array<i64: 2, 128>}, {transform_indices = @transform_2, window_bounds = array<i64: 8, 128>}]} {
    %c8_i32 = arith.constant 8 : i32
    %0 = arith.muli %arg0, %c8_i32 : i32
    %1 = tpu.iota {dimensions = array<i32: 0>} : vector<8x128xi32>
    %2 = vector.broadcast %0 : i32 to vector<8x128xi32>
    %3 = arith.addi %1, %2 : vector<8x128xi32>
    %4 = arith.sitofp %3 : vector<8x128xi32> to vector<8x128xf32>
    %c0 = arith.constant 0 : index
    %c0_0 = arith.constant 0 : index
    %5 = vector.load %arg2[%c0, %c0_0] : memref<2x128xf32, #tpu.memory_space<vmem>>, vector<1x128xf32>
    %6 = vector.broadcast %5 : vector<1x128xf32> to vector<8x128xf32>
    %7 = arith.mulf %4, %6 : vector<8x128xf32>
    %c1 = arith.constant 1 : index
    %c0_1 = arith.constant 0 : index
    %8 = vector.load %arg2[%c1, %c0_1] : memref<2x128xf32, #tpu.memory_space<vmem>>, vector<1x128xf32>
    %9 = vector.broadcast %8 : vector<1x128xf32> to vector<8x128xf32>
    %10 = arith.addf %7, %9 : vector<8x128xf32>
    %11 = math.sin %10 : vector<8x128xf32>
    %c0_2 = arith.constant 0 : index
    %12 = memref.load %arg1[%c0_2] : memref<1xf32, #tpu.memory_space<smem>>
    %13 = vector.broadcast %12 : f32 to vector<8x128xf32>
    %14 = arith.mulf %11, %13 : vector<8x128xf32>
    %c0_3 = arith.constant 0 : index
    %c0_4 = arith.constant 0 : index
    %15 = vector.load %arg3[%c0_3, %c0_4] : memref<8x128xf32, #tpu.memory_space<vmem>>, vector<8x128xf32>
    tpu.vector_store %arg3[%c0_3, %c0_4], %14 {strides = array<i32>} : memref<8x128xf32, #tpu.memory_space<vmem>>, vector<8x128xf32>,
    return
  }
  func.func @transform_0(%arg0: i32) -> i32 {
    %c0_i32 = arith.constant 0 : i32
    %c0_i32_0 = arith.constant 0 : i32
    return %c0_i32 : i32
  }
  func.func @transform_1(%arg0: i32) -> (i32, i32) {
    %c0_i32 = arith.constant 0 : i32
    %c0_i32_0 = arith.constant 0 : i32
    %c0_i32_1 = arith.constant 0 : i32
    return %c0_i32, %c0_i32_0 : i32, i32
  }
  func.func @transform_2(%arg0: i32) -> (i32, i32) {
    %c0_i32 = arith.constant 0 : i32
    %c0_i32_0 = arith.constant 0 : i32
    return %arg0, %c0_i32 : i32, i32
  }
}

</mosaic_0001>

<llo_original>
// kernel: tpu_custom_call.1
$region0: #{tpu_custom_call.1}
  #allocation0 [shape = 'u32[]', space=smem, size = 0x4, offset = 0x4, fixed_abs, tag = 'smem constant byte address 0x4 - core index']
  #allocation1 [shape = 'u32[144,128]{1,0:T(1,128)}', space=vmem, size = 0x12000, scoped, tag = 'internal scratch']
  #allocation2 [shape = 'f32[1]{0:T(128)S(6)}', space=smem, size = 0x200, scoped, tag = 'scoped memory for tpu_custom_call.1']
  %s0 = inlined_call_operand.<no memory space> [shape: f32[1], index: 0, kind: input, shape index: {}]
  %s1 = inlined_call_operand.vmem [shape: f32[2,128], index: 1, kind: input, shape index: {}]
  %s2 = inlined_call_operand.hbm [shape: f32[2,128], index: 2, kind: output, shape index: {}]
  %s3 = sld [smem:[#allocation0]]
  $region18: #{tpu_custom_call.1} parent=0
    _
  %s5 = ssub.s32 1, %s3
  %s6 = scalar_select 0, %s5, %s3
  %7 = sst [smem:[#allocation2]] %s0
  $region1: #{tpu_custom_call.1} parent=0
    #allocation3 [shape = 'u8[4096]{0}', space=vmem, size = 0x1000, scoped, tag = 'output window, operand 0, single buffered']
    #allocation4 [shape = 's32[1]{0}', space=sflag, size = 0x4, scoped, tag = 'scoped memory for tpu_custom_call.1']
    %8 = vsyncpa [#allocation4], 0
    // Predicated region
    $region2: #{tpu_custom_call.1} parent=1 // pred_check
      _
    $region3: #{tpu_custom_call.1} parent=1 // pred_check_branch
      %10 = sbr.rel (0) target = $region5
    $region4: #{tpu_custom_call.1} parent=1 // pred_region
      _
    $region5: #{tpu_custom_call.1} parent=1 // pred_fallthru
      _
    // Predicated region
    $region6: #{tpu_custom_call.1} parent=1 // pred_check
      _
    $region7: #{tpu_custom_call.1} parent=1 // pred_check_branch
      %12 = sbr.rel (0) target = $region9
    $region8: #{tpu_custom_call.1} parent=1 // pred_region
      _
    $region9: #{tpu_custom_call.1} parent=1 // pred_fallthru
      _
    %s13 = smul.u32 0, 8
    %v14 = vlaneseq
    %v15 = vshrl.u32 %v14, 7
    %v16 = vstv %s13
    %v17 = vadd.s32 %v15, %v16
    %v18 = vcvt.s32.f32 %v17
    %v19 = vld [vmem:[%s1] sm:$0x1]
    %v20 = vlaneseq
    %v21 = vshrl.u32 %v20, 7
    %v22 = vsub.s32 0, %v21
    %v23 = vrot.slane %v19, %v22
    %v24 = vmul.f32 %v18, %v23
    %v25 = vld [vmem:[%s1 + $0x1] sm:$0x1]
    %v26 = vlaneseq
    %v27 = vshrl.u32 %v26, 7
    %v28 = vsub.s32 0, %v27
    %v29 = vrot.slane %v25, %v28
    %v30 = vadd.f32 %v24, %v29
    %v31 = vand.u32 2147483647, %v30
    %vm32 = vcmp.le.f32.partialorder %v31, 0.7853982
    %vm33 = vcmp.lt.s32.totalorder %v30, 0
    %v34 = vand.u32 %v30, 2139095040
    %v35 = vshrl.u32 %v34, 23
    %v36 = vsub.s32 %v35, 127
    %v37 = vand.u32 2147483647, %v30
    %v38 = vand.u32 %v37, 8388607
    %v39 = vor.u32 %v38, 8388608
    %v40 = vsub.s32 0, %v39
    %v41 = vadd.s32 %v36, 1
    %vm42 = vcmp.gt.s32.totalorder %v41, 0
    %v43 = vsel %vm42, %v41, 0
    %v44 = vshrl.u32 %v43, 5
    %v45 = vand.u32 %v43, 31
    %v46 = vsub.s32 32, %v45
    %v47 = vshrl.u32 683565275, %v46
    %v48 = vshll.u32 683565275, %v45
    %v49 = vshrl.u32 2475754826, %v46
    %v50 = vor.u32 %v48, %v49
    %v51 = vshll.u32 2475754826, %v45
    %v52 = vshrl.u32 2131351028, %v46
    %v53 = vor.u32 %v51, %v52
    %v54 = vshll.u32 2131351028, %v45
    %v55 = vshrl.u32 2102212464, %v46
    %v56 = vor.u32 %v54, %v55
    %v57 = vshll.u32 2102212464, %v45
    %v58 = vshrl.u32 920167782, %v46
    %v59 = vor.u32 %v57, %v58
    %v60 = vshll.u32 920167782, %v45
    %v61 = vshrl.u32 1326507024, %v46
    %v62 = vor.u32 %v60, %v61
    %vm63 = vcmp.lt.s32.totalorder %v44, 1
    %vm64 = vcmp.lt.s32.totalorder %v44, 2
    %vm65 = vcmp.lt.s32.totalorder %v44, 3
    %vm66 = vcmp.lt.s32.totalorder %v44, 4
    %v67 = vsel %vm63, %v47, %v50
    %v68 = vsel %vm66, %v56, 2102212464
    %v69 = vsel %vm65, %v53, %v68
    %v70 = vsel %vm64, %v67, %v69
    %v71 = vsel %vm63, %v50, %v53
    %v72 = vsel %vm66, %v59, 920167782
    %v73 = vsel %vm65, %v56, %v72
    %v74 = vsel %vm64, %v71, %v73
    %v75 = vsel %vm63, %v53, %v56
    %v76 = vsel %vm66, %v62, 1326507024
    %v77 = vsel %vm65, %v59, %v76
    %v78 = vsel %vm64, %v75, %v77
    %v79 = vshll.u32 %v39, 8
    %v80 = vmul.u32.u64.compose %v79, %v78
    %v81 = vextract.low.u32 %v80
    %v82 = vextract.high.u32 %v80
    %v83 = vmul.u32.u64.compose %v79, %v74
    %v84 = vextract.low.u32 %v83
    %v85 = vextract.high.u32 %v83
    %v86 = vmul.u32 %v79, %v70
    %v87 = vadd.s32 %v82, %v84
    %vm88 = vc.u32 %v82, %v84
    %v89 = vadd.s32 %v85, 1
    %v90 = vsel %vm88, %v89, %v85
    %v91 = vadd.s32 %v86, %v90
    %v92 = vadd.s32 %v91, 536870912
    %v93 = vshrl.u32 %v92, 30
    %v94 = vshll.u32 %v93, 30
    %v95 = vsub.s32 %v91, %v94
    %vm96 = vcmp.lt.s32.totalorder %v95, 0
    %v97 = vsub.s32 0, %v95
    %v98 = vsel %vm96, %v97, %v95
    %v99 = vclz %v98
    %v100 = vsub.s32 %v99, 2
    %vm101 = vcmp.gt.s32.totalorder 0, %v100
    %v102 = vsel %vm101, 0, %v100
    %v103 = vsub.s32 32, %v102
    %v104 = vshll.u32 %v95, %v102
    %v105 = vshrl.u32 %v87, %v103
    %v106 = vor.u32 %v104, %v105
    %v107 = vsub.s32 4294967266, %v102
    %v108 = vadd.s32 %v107, 127
    %v109 = vshll.u32 %v108, 23
    %v110 = vor.u32 4788187, %v109
    %v111 = vand.u32 2147483647, %v110
    %v113 = vcvt.s32.f32 %v106
    %v114 = vmul.f32 %v113, %v111
    %v115 = vxor.u32 %v114, 2147483648
    %v116 = vsel %vm33, %v115, %v114
    %v117 = vsub.s32 4, %v93
    %v118 = vsel %vm33, %v117, %v93
    %v119 = vsel %vm32, %v30, %v116
    %v120 = vsel %vm32, 0, %v118
    %v121 = vcosq.f32.pop %v119
    %v122 = vsinq.f32.pop %v119
    %vm123 = vweird.f32 %v30
    %v124 = vadd.s32 %v120, 3
    %v125 = vand.u32 %v124, 3
    %vm126 = vcmp.lt.s32.totalorder %v125, 2
    %vm127 = vcmp.eq.s32.totalorder %v125, 0
    %v128 = vxor.u32 %v122, 2147483648
    %v129 = vsel %vm127, %v121, %v128
    %vm130 = vcmp.eq.s32.totalorder %v125, 2
    %v131 = vxor.u32 %v121, 2147483648
    %v132 = vsel %vm130, %v131, %v122
    %v133 = vsel %vm126, %v129, %v132
    %v134 = vsel %vm123, nan, %v133
    %s135 = sld [smem:[#allocation2]]
    %v136 = vstv %s135
    %v137 = vmul.f32 %v134, %v136
    %138 = vst [vmem:[#allocation3] sm:$0xff] %v137
    // Predicated region
    $region10: #{tpu_custom_call.1} parent=1 // pred_check
      _
    $region11: #{tpu_custom_call.1} parent=1 // pred_check_branch
      %140 = sbr.rel (0) target = $region13
    $region12: #{tpu_custom_call.1} parent=1 // pred_region
      %s142 = ssub.s32 128, 32
      %143 = vsyncadd [#allocation4], %s142
      %s144 = sshll.u32 [#allocation3], 4
      %s145 = int_to_ptr.vmem [resolvable:$true] %s144
      %150 = dma.vmem_to_hbm [thread:$0]  %s145, 32, %s2, [#allocation4], 32, 32, 2
    $region13: #{tpu_custom_call.1} parent=1 // pred_fallthru
      _
    // Predicated region
    $region14: #{tpu_custom_call.1} parent=1 // pred_check
      _
    $region15: #{tpu_custom_call.1} parent=1 // pred_check_branch
      %152 = sbr.rel (0) target = $region17
    $region16: #{tpu_custom_call.1} parent=1 // pred_region
      %153 = dma.done [#allocation4], 128
    $region17: #{tpu_custom_call.1} parent=1 // pred_fallthru
      _
    %154 = vsyncpa [#allocation4], 1

</llo_original>
